<compile_context>
chip_gen: v5e
topology: v5e:2x2
jax: 0.10.0
libtpu: 0.0.40
codegen_flags: <defaults>
</compile_context>

<pallas_src>
import jax
import jax.numpy as jnp
from jax.experimental import pallas as pl
from jax.experimental.pallas import tpu as pltpu

LANES = 128
SUBLANES = 8
MAX_BLOCK_ROWS = 512  # (512, 128) f32 = 256 KiB per block; v7x-safe with double buffering


def _linear_kernel(x_ref, w_ref, b_ref, o_ref):
    # Linear(1, 1) is an elementwise scale + shift: y = x * w + b.
    # w/b are scalars read from SMEM; the VPU broadcasts them across the tile.
    w = w_ref[0, 0]
    b = b_ref[0, 0]
    o_ref[...] = x_ref[...] * w + b


def linear_1x1(x, w, b):
    """Forward of torch.nn.Linear(1, 1).

    x: (..., 1) f32, w: (1, 1) f32 (torch weight), b: (1,) f32 (torch bias).
    Returns an array with the same shape as x (out_features = 1).
    """
    orig_shape = x.shape
    n = x.size

    # Lane-dense repack: flatten, pad, reshape to (rows, 128).
    rows = pl.cdiv(n, LANES)
    rows = ((rows + SUBLANES - 1) // SUBLANES) * SUBLANES          # sublane align
    block_rows = min(MAX_BLOCK_ROWS, rows)
    rows = ((rows + block_rows - 1) // block_rows) * block_rows    # grid align
    padded = rows * LANES

    x_flat = jnp.ravel(x)
    x_slab = jnp.pad(x_flat, (0, padded - n)).reshape(rows, LANES)

    w2 = jnp.reshape(w, (1, 1)).astype(x.dtype)
    b2 = jnp.reshape(b, (1, 1)).astype(x.dtype)

    grid = (rows // block_rows,)

    y_slab = pl.pallas_call(
        _linear_kernel,
        out_shape=jax.ShapeDtypeStruct((rows, LANES), x.dtype),
        grid=grid,
        in_specs=[
            pl.BlockSpec((block_rows, LANES), lambda i: (i, 0)),
            pl.BlockSpec((1, 1), lambda i: (0, 0), memory_space=pltpu.SMEM),
            pl.BlockSpec((1, 1), lambda i: (0, 0), memory_space=pltpu.SMEM),
        ],
        out_specs=pl.BlockSpec((block_rows, LANES), lambda i: (i, 0)),
        compiler_params=pltpu.CompilerParams(
            dimension_semantics=("parallel",),       # v7x: shard blocks over 2 TCs
            vmem_limit_bytes=32 * 1024 * 1024,       # stay within v7x scoped VMEM
        ),
    )(x_slab, w2, b2)

    # Drop tail padding, restore original (..., 1) shape.
    return jnp.ravel(y_slab)[:n].reshape(orig_shape)


if __name__ == "__main__":
    key = jax.random.PRNGKey(0)
    kx, kw, kb = jax.random.split(key, 3)

    # Small batch consistent with the module's forward (Linear over last dim = 1).
    # NOTE: at this size the kernel is pure launch overhead (XLA fusion would
    # win); the layout/grid above only pays off once N is HBM-bound.
    N = 8
    x = jax.random.normal(kx, (N, 1), dtype=jnp.float32)

    # torch.nn.Linear(1, 1) default init: U(-1/sqrt(in), 1/sqrt(in)) with in=1.
    w = jax.random.uniform(kw, (1, 1), dtype=jnp.float32, minval=-1.0, maxval=1.0)
    b = jax.random.uniform(kb, (1,), dtype=jnp.float32, minval=-1.0, maxval=1.0)

    y = linear_1x1(x, w, b)
    y = jax.block_until_ready(y)

    # Pure-JAX reference: y = x @ W^T + b
    y_ref = x @ w.T + b
    assert y.shape == (N, 1)
    assert jnp.allclose(y, y_ref, atol=1e-6, rtol=1e-6)

    # Larger run to exercise the multi-block grid + tail-padding path.
    N2 = 300_000  # not a multiple of 512*128 -> tail padding gets sliced off
    x2 = jax.random.normal(kx, (N2, 1), dtype=jnp.float32)
    y2 = jax.block_until_ready(linear_1x1(x2, w, b))
    y2_ref = x2 * w[0, 0] + b[0]
    assert y2.shape == (N2, 1)
    assert jnp.allclose(y2, y2_ref, atol=1e-5, rtol=1e-5)

    print("KERNEL_OK")
</pallas_src>

<mosaic_0001>
module attributes {stable_mosaic.version = 11 : i64} {
  func.func @_linear_kernel(%arg0: i32, %arg1: memref<8x128xf32, #tpu.memory_space<vmem>>, %arg2: memref<1x1xf32, #tpu.memory_space<smem>>, %arg3: memref<1x1xf32, #tpu.memory_space<smem>>, %arg4: memref<8x128xf32, #tpu.memory_space<vmem>>) attributes {dimension_semantics = [#tpu.dimension_semantics<parallel>], iteration_bounds = array<i64: 1>, scalar_prefetch = 0 : i64, scratch_operands = 0 : i64, tpu.core_type = #tpu.core_type<tc>, window_params = [{transform_indices = @transform_0, window_bounds = array<i64: 8, 128>}, {transform_indices = @transform_1, window_bounds = array<i64: 1, 1>}, {transform_indices = @transform_2, window_bounds = array<i64: 1, 1>}, {transform_indices = @transform_3, window_bounds = array<i64: 8, 128>}]} {
    %c0 = arith.constant 0 : index
    %c0_0 = arith.constant 0 : index
    %0 = memref.load %arg2[%c0, %c0_0] : memref<1x1xf32, #tpu.memory_space<smem>>
    %c0_1 = arith.constant 0 : index
    %c0_2 = arith.constant 0 : index
    %1 = memref.load %arg3[%c0_1, %c0_2] : memref<1x1xf32, #tpu.memory_space<smem>>
    %c0_3 = arith.constant 0 : index
    %c0_4 = arith.constant 0 : index
    %2 = vector.load %arg1[%c0_3, %c0_4] : memref<8x128xf32, #tpu.memory_space<vmem>>, vector<8x128xf32>
    %3 = vector.broadcast %0 : f32 to vector<8x128xf32>
    %4 = arith.mulf %2, %3 : vector<8x128xf32>
    %5 = vector.broadcast %1 : f32 to vector<8x128xf32>
    %6 = arith.addf %4, %5 : vector<8x128xf32>
    %c0_5 = arith.constant 0 : index
    %c0_6 = arith.constant 0 : index
    %7 = vector.load %arg4[%c0_5, %c0_6] : memref<8x128xf32, #tpu.memory_space<vmem>>, vector<8x128xf32>
    tpu.vector_store %arg4[%c0_5, %c0_6], %6 {strides = array<i32>} : memref<8x128xf32, #tpu.memory_space<vmem>>, vector<8x128xf32>,
    return
  }
  func.func @transform_0(%arg0: i32) -> (i32, i32) {
    %c0_i32 = arith.constant 0 : i32
    %c0_i32_0 = arith.constant 0 : i32
    return %arg0, %c0_i32 : i32, i32
  }
  func.func @transform_1(%arg0: i32) -> (i32, i32) {
    %c0_i32 = arith.constant 0 : i32
    %c0_i32_0 = arith.constant 0 : i32
    %c0_i32_1 = arith.constant 0 : i32
    return %c0_i32, %c0_i32_0 : i32, i32
  }
  func.func @transform_2(%arg0: i32) -> (i32, i32) {
    %c0_i32 = arith.constant 0 : i32
    %c0_i32_0 = arith.constant 0 : i32
    %c0_i32_1 = arith.constant 0 : i32
    return %c0_i32, %c0_i32_0 : i32, i32
  }
  func.func @transform_3(%arg0: i32) -> (i32, i32) {
    %c0_i32 = arith.constant 0 : i32
    %c0_i32_0 = arith.constant 0 : i32
    return %arg0, %c0_i32 : i32, i32
  }
}

</mosaic_0001>

<llo_original>
// kernel: tpu_custom_call.1
$region0: #{tpu_custom_call.1}
  #allocation0 [shape = 'u32[]', space=smem, size = 0x4, offset = 0x4, fixed_abs, tag = 'smem constant byte address 0x4 - core index']
  #allocation1 [shape = 'u32[72,128]{1,0:T(1,128)}', space=vmem, size = 0x9000, scoped, tag = 'internal scratch']
  #allocation2 [shape = 'f32[1,1]{1,0:T(1,128)S(6)}', space=smem, size = 0x200, scoped, tag = 'scoped memory for tpu_custom_call.1']
  #allocation3 [shape = 'f32[1,1]{1,0:T(1,128)S(6)}', space=smem, size = 0x200, scoped, tag = 'scoped memory for tpu_custom_call.1']
  %s0 = inlined_call_operand.hbm [shape: f32[8,128], index: 0, kind: input, shape index: {}]
  %s1 = inlined_call_operand.<no memory space> [shape: f32[1,1], index: 1, kind: input, shape index: {}]
  %s2 = inlined_call_operand.<no memory space> [shape: f32[1,1], index: 2, kind: input, shape index: {}]
  %s3 = inlined_call_operand.hbm [shape: f32[8,128], index: 3, kind: output, shape index: {}]
  %s4 = sld [smem:[#allocation0]]
  $region26: #{tpu_custom_call.1} parent=0
    _
  %s6 = ssub.s32 1, %s4
  %s7 = scalar_select 0, %s6, %s4
  %8 = sst [smem:[#allocation2]] %s1
  %9 = sst [smem:[#allocation3]] %s2
  $region1: #{tpu_custom_call.1} parent=0
    #allocation4 [shape = 'u8[4096]{0}', space=vmem, size = 0x1000, scoped, tag = 'input window, operand 0, single buffered']
    #allocation5 [shape = 's32[1]{0}', space=sflag, size = 0x4, scoped, tag = 'scoped memory for tpu_custom_call.1']
    #allocation6 [shape = 's32[1]{0}', space=sflag, size = 0x4, scoped, tag = 'scoped memory for tpu_custom_call.1']
    #allocation7 [shape = 'u8[4096]{0}', space=vmem, size = 0x1000, scoped, tag = 'output window, operand 0, single buffered']
    %10 = vsyncpa [#allocation5], 0
    %11 = vsyncpa [#allocation6], 0
    // Predicated region
    $region2: #{tpu_custom_call.1} parent=1 // pred_check
      _
    $region3: #{tpu_custom_call.1} parent=1 // pred_check_branch
      %13 = sbr.rel (0) target = $region5
    $region4: #{tpu_custom_call.1} parent=1 // pred_region
      %15 = vsyncadd [#allocation5], 0
      %s17 = sshll.u32 %s0, 4
      %s18 = int_to_ptr.hbm [resolvable:$true] %s17
      %s19 = sshll.u32 [#allocation4], 4
      %s20 = int_to_ptr.vmem [resolvable:$true] %s19
      %22 = dma.hbm_to_vmem [thread:$0]  %s18, 128, %s20, [#allocation5]
    $region5: #{tpu_custom_call.1} parent=1 // pred_fallthru
      _
    // Predicated region
    $region6: #{tpu_custom_call.1} parent=1 // pred_check
      _
    $region7: #{tpu_custom_call.1} parent=1 // pred_check_branch
      %24 = sbr.rel (0) target = $region9
    $region8: #{tpu_custom_call.1} parent=1 // pred_region
      _
    $region9: #{tpu_custom_call.1} parent=1 // pred_fallthru
      _
    // Predicated region
    $region10: #{tpu_custom_call.1} parent=1 // pred_check
      _
    $region11: #{tpu_custom_call.1} parent=1 // pred_check_branch
      %26 = sbr.rel (0) target = $region13
    $region12: #{tpu_custom_call.1} parent=1 // pred_region
      _
    $region13: #{tpu_custom_call.1} parent=1 // pred_fallthru
      _
    // Predicated region
    $region14: #{tpu_custom_call.1} parent=1 // pred_check
      _
    $region15: #{tpu_custom_call.1} parent=1 // pred_check_branch
      %28 = sbr.rel (0) target = $region17
    $region16: #{tpu_custom_call.1} parent=1 // pred_region
      %30 = dma.done [#allocation5], 128
    $region17: #{tpu_custom_call.1} parent=1 // pred_fallthru
      _
    %s31 = sld [smem:[#allocation2]]
    %s32 = sld [smem:[#allocation3]]
    %v33 = vld [vmem:[#allocation4] sm:$0xff]
    %v34 = vstv %s31
    %v35 = vmul.f32 %v33, %v34
    %v36 = vstv %s32
    %v37 = vadd.f32 %v35, %v36
    %38 = vst [vmem:[#allocation7] sm:$0xff] %v37
    // Predicated region
    $region18: #{tpu_custom_call.1} parent=1 // pred_check
      _
    $region19: #{tpu_custom_call.1} parent=1 // pred_check_branch
      %40 = sbr.rel (0) target = $region21
    $region20: #{tpu_custom_call.1} parent=1 // pred_region
      %42 = vsyncadd [#allocation6], 0
      %s44 = sshll.u32 [#allocation7], 4
      %s45 = int_to_ptr.vmem [resolvable:$true] %s44
      %s46 = sshll.u32 %s3, 4
      %s47 = int_to_ptr.hbm [resolvable:$true] %s46
      %49 = dma.vmem_to_hbm [thread:$0]  %s45, 128, %s47, [#allocation6]
    $region21: #{tpu_custom_call.1} parent=1 // pred_fallthru
      _
    // Predicated region
    $region22: #{tpu_custom_call.1} parent=1 // pred_check
      _
    $region23: #{tpu_custom_call.1} parent=1 // pred_check_branch
      %51 = sbr.rel (0) target = $region25
    $region24: #{tpu_custom_call.1} parent=1 // pred_region
      %53 = dma.done [#allocation6], 128
    $region25: #{tpu_custom_call.1} parent=1 // pred_fallthru
      _
    %54 = vsyncpa [#allocation5], 1
    %55 = vsyncpa [#allocation6], 1

</llo_original>
